<compile_context>
chip_gen: v7x
topology: tpu7x:2x2x1
jax: 0.10.0
libtpu: 0.0.40
codegen_flags: <defaults>
</compile_context>

<pallas_src>
import functools

import jax
import jax.numpy as jnp
from jax.experimental import pallas as pl
from jax.experimental.pallas import tpu as pltpu


# ----------------------------------------------------------------------------
# Kernel
# ----------------------------------------------------------------------------
def _make_fused_kernel(num_layers, *, bf16_matmul, approx_gelu):
    """Kernel computing all `num_layers` layers on one batch tile.

    Ref order: x_ref, (w0, p0), (w1, p1), ..., o_ref
    p_l is an (8, d_out) packed param block: row0 = bias, row1 = gamma, row2 = beta.
    """
    sqrt_2_over_pi = 0.7978845608028654
    gelu_c = 0.044715
    inv_sqrt2 = 0.7071067811865476

    def kernel(x_ref, *refs):
        o_ref = refs[-1]
        x = x_ref[...]                                      # (bm, d_in) f32

        for l in range(num_layers):
            w_ref = refs[2 * l]                             # (d_in, d_out) bf16/f32
            p_ref = refs[2 * l + 1]                         # (8, d_out)    f32

            bias = p_ref[0:1, :]
            gamma = p_ref[1:2, :]
            beta = p_ref[2:3, :]

            # ---- Linear (MXU, bf16 operands + f32 accumulation) ----
            lhs = x.astype(jnp.bfloat16) if bf16_matmul else x
            y = jnp.dot(lhs, w_ref[...], preferred_element_type=jnp.float32)
            y = y + bias

            # ---- GELU (x2): the leading 0.5 is folded into the normalizer
            # (standardization is scale invariant; eps -> 2*eps). Exact algebra.
            if approx_gelu:
                inner = jnp.float32(sqrt_2_over_pi) * (
                    y + jnp.float32(gelu_c) * (y * y * y))
                g = y * (1.0 + jnp.tanh(inner))             # tanh -> EUP slot
            else:
                g = y * (1.0 + jax.lax.erf(y * jnp.float32(inv_sqrt2)))

            # ---- FeatureNormalizer (f32 reductions; unbiased std like torch.std)
            n = g.shape[-1]
            mu = jnp.mean(g, axis=-1, keepdims=True)        # (bm, 1)
            d = g - mu
            var = jnp.sum(d * d, axis=-1, keepdims=True) * jnp.float32(1.0 / (n - 1))
            sigma = jnp.sqrt(var)                           # (bm, 1) == 2*sigma_gelu
            # Exact reciprocal on a narrow (bm,1) column (negligible cost).
            inv = pl.reciprocal(sigma + jnp.float32(2e-6), approx=False)
            x = gamma * (d * inv) + beta

        o_ref[...] = x.astype(o_ref.dtype)

    return kernel


# ----------------------------------------------------------------------------
# Helpers
# ----------------------------------------------------------------------------
def _pack_params(b, gamma, beta):
    """Pack bias/gamma/beta into one (8, d) f32 block (rows 0/1/2 used)."""
    d = b.shape[0]
    p = jnp.zeros((8, d), jnp.float32)
    p = p.at[0, :].set(b.astype(jnp.float32))
    p = p.at[1, :].set(gamma.astype(jnp.float32))
    p = p.at[2, :].set(beta.astype(jnp.float32))
    return p


def _pick_bm(B, bm):
    """Batch tile: multiple of 8 dividing B, preferring >=2 grid steps (v7x dual-TC)."""
    bm = min(int(bm), B)
    if B % 8 != 0:
        return B                      # fall back to a full-batch block
    if bm >= B and B >= 16:
        bm = B // 2                    # guarantee >= 2 grid steps
    bm = max(8, (bm // 8) * 8)
    while B % bm != 0:
        bm -= 8
    return bm


def _vmem_budget(bm, weights, packed, *, bf16_matmul, single_buffer):
    """Explicit scoped-VMEM budget: resident weights + tiles + temp headroom."""
    nbuf = 1 if single_buffer else 2
    w_bytes = sum(w.shape[0] * w.shape[1] for w in weights) * (2 if bf16_matmul else 4) * nbuf
    p_bytes = sum(p.shape[0] * p.shape[1] for p in packed) * 4 * nbuf
    d_in = weights[0].shape[0]
    d_last = weights[-1].shape[1]
    d_max = max(max(w.shape) for w in weights)
    io_bytes = 2 * bm * (d_in + d_last) * 4       # double-buffered x / out tiles
    tmp_bytes = 8 * bm * d_max * 4                # f32 (bm, d) temporaries / spill headroom
    budget = int(1.5 * (w_bytes + p_bytes + io_bytes + tmp_bytes)) + (8 << 20)
    # Keep under ~48 MiB so v7x (64 MiB physical VMEM) retains pipeline headroom.
    return max(16 << 20, min(budget, 48 << 20))


_SINGLE_BUFFER_OK = None


def _single_buffering_supported():
    """Probe once whether pipeline_mode=pl.Buffered(1) is supported; else fall back."""
    global _SINGLE_BUFFER_OK
    if _SINGLE_BUFFER_OK is None:
        try:
            def _probe(a_ref, o_ref):
                o_ref[...] = a_ref[...] + 1.0

            f = pl.pallas_call(
                _probe,
                out_shape=jax.ShapeDtypeStruct((16, 128), jnp.float32),
                grid=(2,),
                in_specs=[pl.BlockSpec((8, 128), lambda i: (0, 0),
                                       pipeline_mode=pl.Buffered(1))],
                out_specs=pl.BlockSpec((8, 128), lambda i: (i, 0)),
            )
            jax.block_until_ready(f(jnp.zeros((8, 128), jnp.float32)))
            _SINGLE_BUFFER_OK = True
        except Exception:
            _SINGLE_BUFFER_OK = False
    return _SINGLE_BUFFER_OK


# ----------------------------------------------------------------------------
# pallas_call wrapper
# ----------------------------------------------------------------------------
def _fused_forward(x, weights, packed, *, bm, bf16_matmul, approx_gelu, single_buffer):
    B, d_in = x.shape
    num_layers = len(weights)
    d_last = weights[-1].shape[1]

    assert B % bm == 0, "batch must be divisible by batch tile"

    resident_mode = (
        {"pipeline_mode": pl.Buffered(1)} if single_buffer else {}
    )

    in_specs = [pl.BlockSpec((bm, d_in), lambda i: (i, 0))]          # x rows
    flat_inputs = [x]
    for w, p in zip(weights, packed):
        di, do = w.shape
        # Full (constant) blocks -> weights / params stay resident in VMEM;
        # single-buffered when supported (constant index_map, never re-fetched).
        in_specs.append(pl.BlockSpec((di, do), lambda i: (0, 0), **resident_mode))
        in_specs.append(pl.BlockSpec((8, do), lambda i: (0, 0), **resident_mode))
        flat_inputs.append(w)
        flat_inputs.append(p)

    vmem_limit = _vmem_budget(bm, weights, packed,
                              bf16_matmul=bf16_matmul, single_buffer=single_buffer)

    return pl.pallas_call(
        _make_fused_kernel(num_layers, bf16_matmul=bf16_matmul, approx_gelu=approx_gelu),
        out_shape=jax.ShapeDtypeStruct((B, d_last), jnp.float32),
        grid_spec=pltpu.PrefetchScalarGridSpec(
            num_scalar_prefetch=0,
            grid=(B // bm,),
            in_specs=in_specs,
            out_specs=pl.BlockSpec((bm, d_last), lambda i: (i, 0)),
        ),
        compiler_params=pltpu.CompilerParams(
            dimension_semantics=("parallel",),
            vmem_limit_bytes=vmem_limit,
        ),
    )(*flat_inputs)


@functools.partial(
    jax.jit, static_argnames=("bm", "bf16_matmul", "approx_gelu", "single_buffer"))
def _hierarchical_fusion_jit(x, params, *, bm, bf16_matmul, approx_gelu, single_buffer):
    weights = []
    packed = []
    for (w, b, g, be) in params:
        weights.append(w.astype(jnp.bfloat16) if bf16_matmul else w.astype(jnp.float32))
        packed.append(_pack_params(b, g, be))
    return _fused_forward(x, weights, packed, bm=bm, bf16_matmul=bf16_matmul,
                          approx_gelu=approx_gelu, single_buffer=single_buffer)


def hierarchical_fusion(x, params, *, bm=256, bf16_matmul=True, approx_gelu=True):
    """params: list of (W[d_in,d_out], b[d_out], gamma[d_out], beta[d_out]).

    bf16_matmul=False and approx_gelu=False give exact nn.GELU()/f32 parity.
    Dropout(0.3): identity (eval mode).
    """
    bm = _pick_bm(x.shape[0], bm)
    single_buffer = _single_buffering_supported()
    return _hierarchical_fusion_jit(x, params, bm=bm, bf16_matmul=bf16_matmul,
                                    approx_gelu=approx_gelu, single_buffer=single_buffer)


# ----------------------------------------------------------------------------
# Reference & init
# ----------------------------------------------------------------------------
def init_params(key, input_dim, hidden_dims):
    dims = [input_dim] + list(hidden_dims)
    params = []
    for i in range(len(dims) - 1):
        key, kw, kb, kg, ke = jax.random.split(key, 5)
        d_in, d_out = dims[i], dims[i + 1]
        w = jax.random.normal(kw, (d_in, d_out), jnp.float32) * (1.0 / jnp.sqrt(d_in))
        b = jax.random.normal(kb, (d_out,), jnp.float32) * 0.01
        gamma = 1.0 + 0.1 * jax.random.normal(kg, (d_out,), jnp.float32)
        beta = 0.01 * jax.random.normal(ke, (d_out,), jnp.float32)
        params.append((w, b, gamma, beta))
    return params


def reference_forward(x, params, *, approx_gelu=False, bf16_matmul=False):
    """Pure-JAX reference of the PyTorch forward (optionally bf16/tanh to match
    the kernel's performance mode quantization)."""
    for (w, b, gamma, beta) in params:
        if bf16_matmul:
            y = jnp.dot(x.astype(jnp.bfloat16), w.astype(jnp.bfloat16),
                        preferred_element_type=jnp.float32) + b
        else:
            y = jnp.dot(x, w, preferred_element_type=jnp.float32) + b
        y = jax.nn.gelu(y, approximate=approx_gelu)
        mu = y.mean(-1, keepdims=True)
        d = y - mu
        var = (d * d).sum(-1, keepdims=True) / (y.shape[-1] - 1)
        sigma = jnp.sqrt(var)
        x = gamma * d / (sigma + 1e-6) + beta
    return x


# ----------------------------------------------------------------------------
# Self-test
# ----------------------------------------------------------------------------
if __name__ == "__main__":
    key = jax.random.PRNGKey(0)
    key, kx = jax.random.split(key)

    # Small but lane-aligned test config (production is 512-wide; 128 keeps the
    # same layout properties — d % 128 == 0 — at a fraction of the size).
    batch = 256
    input_dim = 128
    hidden_dims = [128, 128, 128]

    x = jax.random.normal(kx, (batch, input_dim), jnp.float32)
    params = init_params(key, input_dim, hidden_dims)

    # 1) Performance mode (default): bf16 MXU matmuls + tanh GELU.
    #    Verified against a pure-JAX reference using the same quantization.
    out = hierarchical_fusion(x, params, bm=256)
    jax.block_until_ready(out)
    assert out.shape == (batch, hidden_dims[-1])
    assert bool(jnp.all(jnp.isfinite(out)))
    ref_fast = reference_forward(x, params, approx_gelu=True, bf16_matmul=True)
    err_fast = float(jnp.max(jnp.abs(out - ref_fast)))
    assert bool(jnp.allclose(out, ref_fast, rtol=5e-3, atol=5e-3)), err_fast

    # 2) Parity mode: exact erf GELU + f32 matmul -> matches the PyTorch module
    #    (nn.GELU() default, torch.std-based normalizer) to f32 accuracy.
    out_exact = hierarchical_fusion(x, params, bm=256, bf16_matmul=False, approx_gelu=False)
    jax.block_until_ready(out_exact)
    ref_exact = reference_forward(x, params, approx_gelu=False, bf16_matmul=False)
    err_exact = float(jnp.max(jnp.abs(out_exact - ref_exact)))
    assert bool(jnp.allclose(out_exact, ref_exact, rtol=5e-3, atol=5e-3)), err_exact

    print("KERNEL_OK")
</pallas_src>

<mosaic_0001>
module attributes {stable_mosaic.version = 11 : i64} {
  func.func @_probe(%arg0: i32, %arg1: memref<8x128xf32, #tpu.memory_space<vmem>>, %arg2: memref<8x128xf32, #tpu.memory_space<vmem>>) attributes {dimension_semantics = [#tpu.dimension_semantics<arbitrary>], iteration_bounds = array<i64: 2>, scalar_prefetch = 0 : i64, scratch_operands = 0 : i64, tpu.core_type = #tpu.core_type<tc>, window_params = [{pipeline_mode = #tpu.pipeline_mode<synchronous>, transform_indices = @transform_0, window_bounds = array<i64: 8, 128>}, {transform_indices = @transform_1, window_bounds = array<i64: 8, 128>}]} {
    %c0 = arith.constant 0 : index
    %c0_0 = arith.constant 0 : index
    %0 = vector.load %arg1[%c0, %c0_0] : memref<8x128xf32, #tpu.memory_space<vmem>>, vector<8x128xf32>
    %cst = arith.constant 1.000000e+00 : f32
    %1 = vector.broadcast %cst : f32 to vector<8x128xf32>
    %2 = arith.addf %0, %1 : vector<8x128xf32>
    %c0_1 = arith.constant 0 : index
    %c0_2 = arith.constant 0 : index
    %3 = vector.load %arg2[%c0_1, %c0_2] : memref<8x128xf32, #tpu.memory_space<vmem>>, vector<8x128xf32>
    tpu.vector_store %arg2[%c0_1, %c0_2], %2 {strides = array<i32>} : memref<8x128xf32, #tpu.memory_space<vmem>>, vector<8x128xf32>,
    return
  }
  func.func @transform_0(%arg0: i32) -> (i32, i32) {
    %c0_i32 = arith.constant 0 : i32
    %c0_i32_0 = arith.constant 0 : i32
    %c0_i32_1 = arith.constant 0 : i32
    return %c0_i32, %c0_i32_0 : i32, i32
  }
  func.func @transform_1(%arg0: i32) -> (i32, i32) {
    %c0_i32 = arith.constant 0 : i32
    %c0_i32_0 = arith.constant 0 : i32
    return %arg0, %c0_i32 : i32, i32
  }
}

module attributes {stable_mosaic.version = 11 : i64} {
  func.func @kernel(%arg0: i32, %arg1: memref<128x128xf32, #tpu.memory_space<vmem>>, %arg2: memref<128x128xbf16, #tpu.memory_space<vmem>>, %arg3: memref<8x128xf32, #tpu.memory_space<vmem>>, %arg4: memref<128x128xbf16, #tpu.memory_space<vmem>>, %arg5: memref<8x128xf32, #tpu.memory_space<vmem>>, %arg6: memref<128x128xbf16, #tpu.memory_space<vmem>>, %arg7: memref<8x128xf32, #tpu.memory_space<vmem>>, %arg8: memref<128x128xf32, #tpu.memory_space<vmem>>) attributes {dimension_semantics = [#tpu.dimension_semantics<parallel>], iteration_bounds = array<i64: 2>, scalar_prefetch = 0 : i64, scratch_operands = 0 : i64, tpu.core_type = #tpu.core_type<tc>, window_params = [{transform_indices = @transform_0, window_bounds = array<i64: 128, 128>}, {pipeline_mode = #tpu.pipeline_mode<synchronous>, transform_indices = @transform_1, window_bounds = array<i64: 128, 128>}, {pipeline_mode = #tpu.pipeline_mode<synchronous>, transform_indices = @transform_2, window_bounds = array<i64: 8, 128>}, {pipeline_mode = #tpu.pipeline_mode<synchronous>, transform_indices = @transform_3, window_bounds = array<i64: 128, 128>}, {pipeline_mode = #tpu.pipeline_mode<synchronous>, transform_indices = @transform_4, window_bounds = array<i64: 8, 128>}, {pipeline_mode = #tpu.pipeline_mode<synchronous>, transform_indices = @transform_5, window_bounds = array<i64: 128, 128>}, {pipeline_mode = #tpu.pipeline_mode<synchronous>, transform_indices = @transform_6, window_bounds = array<i64: 8, 128>}, {transform_indices = @transform_7, window_bounds = array<i64: 128, 128>}]} {
    %c0 = arith.constant 0 : index
    %c0_0 = arith.constant 0 : index
    %0 = vector.load %arg1[%c0, %c0_0] : memref<128x128xf32, #tpu.memory_space<vmem>>, vector<128x128xf32>
    %c0_1 = arith.constant 0 : index
    %c0_2 = arith.constant 0 : index
    %1 = vector.load %arg3[%c0_1, %c0_2] : memref<8x128xf32, #tpu.memory_space<vmem>>, vector<1x128xf32>
    %c1 = arith.constant 1 : index
    %c0_3 = arith.constant 0 : index
    %2 = vector.load %arg3[%c1, %c0_3] : memref<8x128xf32, #tpu.memory_space<vmem>>, vector<1x128xf32>
    %c2 = arith.constant 2 : index
    %c0_4 = arith.constant 0 : index
    %3 = vector.load %arg3[%c2, %c0_4] : memref<8x128xf32, #tpu.memory_space<vmem>>, vector<1x128xf32>
    %4 = arith.truncf %0 : vector<128x128xf32> to vector<128x128xbf16>
    %c0_5 = arith.constant 0 : index
    %c0_6 = arith.constant 0 : index
    %5 = vector.load %arg2[%c0_5, %c0_6] : memref<128x128xbf16, #tpu.memory_space<vmem>>, vector<128x128xbf16>
    %cst = arith.constant dense<0.000000e+00> : vector<128x128xf32>
    %6 = tpu.matmul %4, %5, %cst {dimension_numbers = #tpu.dot_dimension_numbers<[1], [0], [0], [1], [0, 0, 1, 1], [], []>} : vector<128x128xbf16>, vector<128x128xbf16>, vector<128x128xf32> -> vector<128x128xf32>
    %7 = vector.broadcast %1 : vector<1x128xf32> to vector<128x128xf32>
    %8 = arith.addf %6, %7 : vector<128x128xf32>
    %9 = arith.mulf %8, %8 : vector<128x128xf32>
    %10 = arith.mulf %9, %8 : vector<128x128xf32>
    %cst_7 = arith.constant 4.471500e-02 : f32
    %11 = vector.broadcast %cst_7 : f32 to vector<128x128xf32>
    %12 = arith.mulf %11, %10 : vector<128x128xf32>
    %13 = arith.addf %8, %12 : vector<128x128xf32>
    %cst_8 = arith.constant 0.797884583 : f32
    %14 = vector.broadcast %cst_8 : f32 to vector<128x128xf32>
    %15 = arith.mulf %14, %13 : vector<128x128xf32>
    %16 = math.tanh %15 : vector<128x128xf32>
    %cst_9 = arith.constant 1.000000e+00 : f32
    %17 = vector.broadcast %cst_9 : f32 to vector<128x128xf32>
    %18 = arith.addf %17, %16 : vector<128x128xf32>
    %19 = arith.mulf %8, %18 : vector<128x128xf32>
    %cst_10 = arith.constant dense<0.000000e+00> : vector<128xf32>
    %20 = vector.multi_reduction <add>, %19, %cst_10 [1] : vector<128x128xf32> to vector<128xf32>
    %21 = vector.shape_cast %20 : vector<128xf32> to vector<128x1xf32>
    %cst_11 = arith.constant 1.280000e+02 : f32
    %22 = vector.broadcast %cst_11 : f32 to vector<128x1xf32>
    %23 = arith.divf %21, %22 : vector<128x1xf32>
    %24 = vector.broadcast %23 : vector<128x1xf32> to vector<128x128xf32>
    %25 = arith.subf %19, %24 : vector<128x128xf32>
    %26 = arith.mulf %25, %25 : vector<128x128xf32>
    %cst_12 = arith.constant dense<0.000000e+00> : vector<128xf32>
    %27 = vector.multi_reduction <add>, %26, %cst_12 [1] : vector<128x128xf32> to vector<128xf32>
    %28 = vector.shape_cast %27 : vector<128xf32> to vector<128x1xf32>
    %cst_13 = arith.constant 0.00787401571 : f32
    %29 = vector.broadcast %cst_13 : f32 to vector<128x1xf32>
    %30 = arith.mulf %28, %29 : vector<128x1xf32>
    %31 = math.sqrt %30 : vector<128x1xf32>
    %cst_14 = arith.constant 2.000000e-06 : f32
    %32 = vector.broadcast %cst_14 : f32 to vector<128x1xf32>
    %33 = arith.addf %31, %32 : vector<128x1xf32>
    %34 = tpu.reciprocal %33 : vector<128x1xf32> -> vector<128x1xf32>
    %35 = vector.broadcast %34 : vector<128x1xf32> to vector<128x128xf32>
    %36 = arith.mulf %25, %35 : vector<128x128xf32>
    %37 = vector.broadcast %2 : vector<1x128xf32> to vector<128x128xf32>
    %38 = arith.mulf %37, %36 : vector<128x128xf32>
    %39 = vector.broadcast %3 : vector<1x128xf32> to vector<128x128xf32>
    %40 = arith.addf %38, %39 : vector<128x128xf32>
    %c0_15 = arith.constant 0 : index
    %c0_16 = arith.constant 0 : index
    %41 = vector.load %arg5[%c0_15, %c0_16] : memref<8x128xf32, #tpu.memory_space<vmem>>, vector<1x128xf32>
    %c1_17 = arith.constant 1 : index
    %c0_18 = arith.constant 0 : index
    %42 = vector.load %arg5[%c1_17, %c0_18] : memref<8x128xf32, #tpu.memory_space<vmem>>, vector<1x128xf32>
    %c2_19 = arith.constant 2 : index
    %c0_20 = arith.constant 0 : index
    %43 = vector.load %arg5[%c2_19, %c0_20] : memref<8x128xf32, #tpu.memory_space<vmem>>, vector<1x128xf32>
    %44 = arith.truncf %40 : vector<128x128xf32> to vector<128x128xbf16>
    %c0_21 = arith.constant 0 : index
    %c0_22 = arith.constant 0 : index
    %45 = vector.load %arg4[%c0_21, %c0_22] : memref<128x128xbf16, #tpu.memory_space<vmem>>, vector<128x128xbf16>
    %cst_23 = arith.constant dense<0.000000e+00> : vector<128x128xf32>
    %46 = tpu.matmul %44, %45, %cst_23 {dimension_numbers = #tpu.dot_dimension_numbers<[1], [0], [0], [1], [0, 0, 1, 1], [], []>} : vector<128x128xbf16>, vector<128x128xbf16>, vector<128x128xf32> -> vector<128x128xf32>
    %47 = vector.broadcast %41 : vector<1x128xf32> to vector<128x128xf32>
    %48 = arith.addf %46, %47 : vector<128x128xf32>
    %49 = arith.mulf %48, %48 : vector<128x128xf32>
    %50 = arith.mulf %49, %48 : vector<128x128xf32>
    %cst_24 = arith.constant 4.471500e-02 : f32
    %51 = vector.broadcast %cst_24 : f32 to vector<128x128xf32>
    %52 = arith.mulf %51, %50 : vector<128x128xf32>
    %53 = arith.addf %48, %52 : vector<128x128xf32>
    %cst_25 = arith.constant 0.797884583 : f32
    %54 = vector.broadcast %cst_25 : f32 to vector<128x128xf32>
    %55 = arith.mulf %54, %53 : vector<128x128xf32>
    %56 = math.tanh %55 : vector<128x128xf32>
    %cst_26 = arith.constant 1.000000e+00 : f32
    %57 = vector.broadcast %cst_26 : f32 to vector<128x128xf32>
    %58 = arith.addf %57, %56 : vector<128x128xf32>
    %59 = arith.mulf %48, %58 : vector<128x128xf32>
    %cst_27 = arith.constant dense<0.000000e+00> : vector<128xf32>
    %60 = vector.multi_reduction <add>, %59, %cst_27 [1] : vector<128x128xf32> to vector<128xf32>
    %61 = vector.shape_cast %60 : vector<128xf32> to vector<128x1xf32>
    %cst_28 = arith.constant 1.280000e+02 : f32
    %62 = vector.broadcast %cst_28 : f32 to vector<128x1xf32>
    %63 = arith.divf %61, %62 : vector<128x1xf32>
    %64 = vector.broadcast %63 : vector<128x1xf32> to vector<128x128xf32>
    %65 = arith.subf %59, %64 : vector<128x128xf32>
    %66 = arith.mulf %65, %65 : vector<128x128xf32>
    %cst_29 = arith.constant dense<0.000000e+00> : vector<128xf32>
    %67 = vector.multi_reduction <add>, %66, %cst_29 [1] : vector<128x128xf32> to vector<128xf32>
    %68 = vector.shape_cast %67 : vector<128xf32> to vector<128x1xf32>
    %cst_30 = arith.constant 0.00787401571 : f32
    %69 = vector.broadcast %cst_30 : f32 to vector<128x1xf32>
    %70 = arith.mulf %68, %69 : vector<128x1xf32>
    %71 = math.sqrt %70 : vector<128x1xf32>
    %cst_31 = arith.constant 2.000000e-06 : f32
    %72 = vector.broadcast %cst_31 : f32 to vector<128x1xf32>
    %73 = arith.addf %71, %72 : vector<128x1xf32>
    %74 = tpu.reciprocal %73 : vector<128x1xf32> -> vector<128x1xf32>
    %75 = vector.broadcast %74 : vector<128x1xf32> to vector<128x128xf32>
    %76 = arith.mulf %65, %75 : vector<128x128xf32>
    %77 = vector.broadcast %42 : vector<1x128xf32> to vector<128x128xf32>
    %78 = arith.mulf %77, %76 : vector<128x128xf32>
    %79 = vector.broadcast %43 : vector<1x128xf32> to vector<128x128xf32>
    %80 = arith.addf %78, %79 : vector<128x128xf32>
    %c0_32 = arith.constant 0 : index
    %c0_33 = arith.constant 0 : index
    %81 = vector.load %arg7[%c0_32, %c0_33] : memref<8x128xf32, #tpu.memory_space<vmem>>, vector<1x128xf32>
    %c1_34 = arith.constant 1 : index
    %c0_35 = arith.constant 0 : index
    %82 = vector.load %arg7[%c1_34, %c0_35] : memref<8x128xf32, #tpu.memory_space<vmem>>, vector<1x128xf32>
    %c2_36 = arith.constant 2 : index
    %c0_37 = arith.constant 0 : index
    %83 = vector.load %arg7[%c2_36, %c0_37] : memref<8x128xf32, #tpu.memory_space<vmem>>, vector<1x128xf32>
    %84 = arith.truncf %80 : vector<128x128xf32> to vector<128x128xbf16>
    %c0_38 = arith.constant 0 : index
    %c0_39 = arith.constant 0 : index
    %85 = vector.load %arg6[%c0_38, %c0_39] : memref<128x128xbf16, #tpu.memory_space<vmem>>, vector<128x128xbf16>
    %cst_40 = arith.constant dense<0.000000e+00> : vector<128x128xf32>
    %86 = tpu.matmul %84, %85, %cst_40 {dimension_numbers = #tpu.dot_dimension_numbers<[1], [0], [0], [1], [0, 0, 1, 1], [], []>} : vector<128x128xbf16>, vector<128x128xbf16>, vector<128x128xf32> -> vector<128x128xf32>
    %87 = vector.broadcast %81 : vector<1x128xf32> to vector<128x128xf32>
    %88 = arith.addf %86, %87 : vector<128x128xf32>
    %89 = arith.mulf %88, %88 : vector<128x128xf32>
    %90 = arith.mulf %89, %88 : vector<128x128xf32>
    %cst_41 = arith.constant 4.471500e-02 : f32
    %91 = vector.broadcast %cst_41 : f32 to vector<128x128xf32>
    %92 = arith.mulf %91, %90 : vector<128x128xf32>
    %93 = arith.addf %88, %92 : vector<128x128xf32>
    %cst_42 = arith.constant 0.797884583 : f32
    %94 = vector.broadcast %cst_42 : f32 to vector<128x128xf32>
    %95 = arith.mulf %94, %93 : vector<128x128xf32>
    %96 = math.tanh %95 : vector<128x128xf32>
    %cst_43 = arith.constant 1.000000e+00 : f32
    %97 = vector.broadcast %cst_43 : f32 to vector<128x128xf32>
    %98 = arith.addf %97, %96 : vector<128x128xf32>
    %99 = arith.mulf %88, %98 : vector<128x128xf32>
    %cst_44 = arith.constant dense<0.000000e+00> : vector<128xf32>
    %100 = vector.multi_reduction <add>, %99, %cst_44 [1] : vector<128x128xf32> to vector<128xf32>
    %101 = vector.shape_cast %100 : vector<128xf32> to vector<128x1xf32>
    %cst_45 = arith.constant 1.280000e+02 : f32
    %102 = vector.broadcast %cst_45 : f32 to vector<128x1xf32>
    %103 = arith.divf %101, %102 : vector<128x1xf32>
    %104 = vector.broadcast %103 : vector<128x1xf32> to vector<128x128xf32>
    %105 = arith.subf %99, %104 : vector<128x128xf32>
    %106 = arith.mulf %105, %105 : vector<128x128xf32>
    %cst_46 = arith.constant dense<0.000000e+00> : vector<128xf32>
    %107 = vector.multi_reduction <add>, %106, %cst_46 [1] : vector<128x128xf32> to vector<128xf32>
    %108 = vector.shape_cast %107 : vector<128xf32> to vector<128x1xf32>
    %cst_47 = arith.constant 0.00787401571 : f32
    %109 = vector.broadcast %cst_47 : f32 to vector<128x1xf32>
    %110 = arith.mulf %108, %109 : vector<128x1xf32>
    %111 = math.sqrt %110 : vector<128x1xf32>
    %cst_48 = arith.constant 2.000000e-06 : f32
    %112 = vector.broadcast %cst_48 : f32 to vector<128x1xf32>
    %113 = arith.addf %111, %112 : vector<128x1xf32>
    %114 = tpu.reciprocal %113 : vector<128x1xf32> -> vector<128x1xf32>
    %115 = vector.broadcast %114 : vector<128x1xf32> to vector<128x128xf32>
    %116 = arith.mulf %105, %115 : vector<128x128xf32>
    %117 = vector.broadcast %82 : vector<1x128xf32> to vector<128x128xf32>
    %118 = arith.mulf %117, %116 : vector<128x128xf32>
    %119 = vector.broadcast %83 : vector<1x128xf32> to vector<128x128xf32>
    %120 = arith.addf %118, %119 : vector<128x128xf32>
    %c0_49 = arith.constant 0 : index
    %c0_50 = arith.constant 0 : index
    %121 = vector.load %arg8[%c0_49, %c0_50] : memref<128x128xf32, #tpu.memory_space<vmem>>, vector<128x128xf32>
    tpu.vector_store %arg8[%c0_49, %c0_50], %120 {strides = array<i32>} : memref<128x128xf32, #tpu.memory_space<vmem>>, vector<128x128xf32>,
    return
  }
  func.func @transform_0(%arg0: i32) -> (i32, i32) {
    %c0_i32 = arith.constant 0 : i32
    %c0_i32_0 = arith.constant 0 : i32
    return %arg0, %c0_i32 : i32, i32
  }
  func.func @transform_1(%arg0: i32) -> (i32, i32) {
    %c0_i32 = arith.constant 0 : i32
    %c0_i32_0 = arith.constant 0 : i32
    %c0_i32_1 = arith.constant 0 : i32
    return %c0_i32, %c0_i32_0 : i32, i32
  }
  func.func @transform_2(%arg0: i32) -> (i32, i32) {
    %c0_i32 = arith.constant 0 : i32
    %c0_i32_0 = arith.constant 0 : i32
    %c0_i32_1 = arith.constant 0 : i32
    return %c0_i32, %c0_i32_0 : i32, i32
  }
  func.func @transform_3(%arg0: i32) -> (i32, i32) {
    %c0_i32 = arith.constant 0 : i32
    %c0_i32_0 = arith.constant 0 : i32
    %c0_i32_1 = arith.constant 0 : i32
    return %c0_i32, %c0_i32_0 : i32, i32
  }
  func.func @transform_4(%arg0: i32) -> (i32, i32) {
    %c0_i32 = arith.constant 0 : i32
    %c0_i32_0 = arith.constant 0 : i32
    %c0_i32_1 = arith.constant 0 : i32
    return %c0_i32, %c0_i32_0 : i32, i32
  }
  func.func @transform_5(%arg0: i32) -> (i32, i32) {
    %c0_i32 = arith.constant 0 : i32
    %c0_i32_0 = arith.constant 0 : i32
    %c0_i32_1 = arith.constant 0 : i32
    return %c0_i32, %c0_i32_0 : i32, i32
  }
  func.func @transform_6(%arg0: i32) -> (i32, i32) {
    %c0_i32 = arith.constant 0 : i32
    %c0_i32_0 = arith.constant 0 : i32
    %c0_i32_1 = arith.constant 0 : i32
    return %c0_i32, %c0_i32_0 : i32, i32
  }
  func.func @transform_7(%arg0: i32) -> (i32, i32) {
    %c0_i32 = arith.constant 0 : i32
    %c0_i32_0 = arith.constant 0 : i32
    return %arg0, %c0_i32 : i32, i32
  }
}

</mosaic_0001>

<llo_original>
// kernel: tpu_custom_call.1
$region0: #{tpu_custom_call.1}
  #allocation0 [shape = 'u32[]', space=smem, size = 0x4, offset = 0x4, fixed_abs, tag = 'smem constant byte address 0x4 - core index']
  #allocation1 [shape = 'u32[144,128]{1,0:T(1,128)}', space=vmem, size = 0x12000, scoped, tag = 'internal scratch']
  %s0 = inlined_call_operand.hbm [shape: f32[8,128], index: 0, kind: input, shape index: {}]
  %s1 = inlined_call_operand.hbm [shape: f32[16,128], index: 1, kind: output, shape index: {}]
  %s2 = sld [smem:[#allocation0]]
  $region41: #{tpu_custom_call.1} parent=0
    _
  %s4 = ssub.s32 1, %s2
  %s5 = scalar_select 0, %s4, %s2
  $region1: #{tpu_custom_call.1} parent=0
    #allocation2 [shape = 'u8[4096]{0}', space=vmem, size = 0x1000, scoped, tag = 'input window, operand 0, single buffered']
    #allocation3 [shape = 's32[2]{0}', space=sflag, size = 0x8, scoped, tag = 'scoped memory for tpu_custom_call.1']
    #allocation4 [shape = 's32[2]{0}', space=sflag, size = 0x8, scoped, tag = 'scoped memory for tpu_custom_call.1']
    #allocation5 [shape = 'u8[8192]{0}', space=vmem, size = 0x2000, scoped, tag = 'output window, operand 0']
    %6 = vsyncpa [#allocation3], 0
    %7 = vsyncpa [#allocation4], 0
    %s8 = scalar_lea.sflag [#allocation4], 1
    %9 = vsyncpa %s8, 0
    loop: start=0, step=1, limit=4
    $region2: #{tpu_custom_call.1} parent=1 // loop_pre_header
      _
    $region3: #{tpu_custom_call.1} parent=1 // loop_header
      %s11 = sphi 0, %s15
      %p12 = scmp.ge.s32.totalorder %s11, 4
      %s19 = sphi 0, %s19
      %s21 = sphi 0, %s19
      %s22 = sphi 0, %s21
      %s36 = sphi 0, %s22
      %s42 = sphi 0, %s44
      %s45 = sphi 0, %s42
      %s46 = sphi 0, %s45
      %s62 = sphi 0, %s46
    $region4: #{tpu_custom_call.1} parent=1 // loop_header_branch
      %14 = sbr.rel (%p12) target = $region8
    $region5: #{tpu_custom_call.1} parent=1 // loop_body
      %s16 = ssub.s32 %s11, 1
      %s17 = ssub.s32 %s11, 2
      %s18 = sadd.s32 %s11, 1
      %s20 = sadd.s32 %s19, 1
      %p23 = scmp.eq.s32.totalorder %s11, 1
      %p24 = scmp.ne.s32.totalorder %s19, %s21
      %p25 = scmp.eq.s32.totalorder %s11, 0
      %p26 = por %p24, %p25
      %p27 = scmp.ne.s32.totalorder %s19, %s21
      %p28 = scmp.eq.s32.totalorder %s16, 1
      %p29 = por %p27, %p28
      %p30 = scmp.ne.s32.totalorder %s21, %s22
      %p31 = scmp.eq.s32.totalorder %s16, 0
      %p32 = por %p30, %p31
      %p33 = scmp.ne.s32.totalorder %s21, %s22
      %p34 = scmp.eq.s32.totalorder %s17, 1
      %p35 = por %p33, %p34
      %p37 = scmp.ne.s32.totalorder %s22, %s36
      %p38 = scmp.eq.s32.totalorder %s17, 0
      %p39 = por %p37, %p38
      %s40 = ssub.s32 %s11, %s18
      %p41 = scmp.eq.s32.totalorder %s40, 0
      %s43 = sadd.s32 %s42, 1
      %s44 = scalar_select %p41, %s42, %s43
      %p47 = pneg %p41
      %p48 = scmp.eq.s32.totalorder %s11, 1
      %p49 = por %p47, %p48
      %p50 = scmp.ne.s32.totalorder %s42, %s45
      %p51 = scmp.eq.s32.totalorder %s11, 0
      %p52 = por %p50, %p51
      %p53 = scmp.ne.s32.totalorder %s42, %s45
      %p54 = scmp.eq.s32.totalorder %s16, 1
      %p55 = por %p53, %p54
      %p56 = scmp.ne.s32.totalorder %s45, %s46
      %p57 = scmp.eq.s32.totalorder %s16, 0
      %p58 = por %p56, %p57
      %p59 = scmp.ne.s32.totalorder %s45, %s46
      %p60 = scmp.eq.s32.totalorder %s17, 1
      %p61 = por %p59, %p60
      %p63 = scmp.ne.s32.totalorder %s46, %s62
      %p64 = scmp.eq.s32.totalorder %s17, 0
      %p65 = por %p63, %p64
      %p66 = scmp.le.s32.totalorder 1, %s11
      %p67 = scmp.lt.s32.totalorder %s11, 3
      %p68 = pnand %p66, %p67
      %p69 = pneg %p68
      // Predicated region
      $region9: #{tpu_custom_call.1} parent=5 // pred_check
        _
      $region10: #{tpu_custom_call.1} parent=5 // pred_check_branch
        %71 = sbr.rel (%p68) target = $region12
      $region11: #{tpu_custom_call.1} parent=5 // pred_region
        %s72 = ssub.s32 %s11, 1
        // Predicated region
        $region13: #{tpu_custom_call.1} parent=11 // pred_check
          %p73 = pneg %p32
        $region14: #{tpu_custom_call.1} parent=11 // pred_check_branch
          %75 = sbr.rel (%p73) target = $region16
        $region15: #{tpu_custom_call.1} parent=11 // pred_region
          %s77 = ssub.s32 128, 128
          %78 = vsyncadd [#allocation3], %s77
          %s80 = sshll.u32 [#allocation2], 4
          %s81 = int_to_ptr.vmem [resolvable:$true] %s80
          %83 = dma.hbm_to_vmem [thread:$0]  %s0, 128, %s81, [#allocation3]
        $region16: #{tpu_custom_call.1} parent=11 // pred_fallthru
          _
      $region12: #{tpu_custom_call.1} parent=5 // pred_fallthru
        _
      %p84 = scmp.lt.s32.totalorder %s11, 2
      // Predicated region
      $region17: #{tpu_custom_call.1} parent=5 // pred_check
        %p85 = pneg %p84
      $region18: #{tpu_custom_call.1} parent=5 // pred_check_branch
        %87 = sbr.rel (%p85) target = $region20
      $region19: #{tpu_custom_call.1} parent=5 // pred_region
        _
      $region20: #{tpu_custom_call.1} parent=5 // pred_fallthru
        _
      %p88 = scmp.le.s32.totalorder 1, %s11
      %p89 = scmp.lt.s32.totalorder %s11, 3
      %p90 = pnand %p88, %p89
      %p91 = pneg %p90
      // Predicated region
      $region21: #{tpu_custom_call.1} parent=5 // pred_check
        _
      $region22: #{tpu_custom_call.1} parent=5 // pred_check_branch
        %93 = sbr.rel (%p90) target = $region24
      $region23: #{tpu_custom_call.1} parent=5 // pred_region
        %s94 = ssub.s32 %s11, 1
        // Predicated region
        $region25: #{tpu_custom_call.1} parent=23 // pred_check
          %p95 = pneg %p32
        $region26: #{tpu_custom_call.1} parent=23 // pred_check_branch
          %97 = sbr.rel (%p95) target = $region28
        $region27: #{tpu_custom_call.1} parent=23 // pred_region
          %98 = dma.done [#allocation3], 128
        $region28: #{tpu_custom_call.1} parent=23 // pred_fallthru
          _
        %p99 = pneg %p32
        %p100 = pneg %p29
        %p101 = pneg %p58
        %p102 = pneg %p55
        %s103 = sand.u32 %s45, 1
        %s104 = scalar_lea.sflag [#allocation4], %s103
        %s105 = sand.u32 %s45, 1
        %s106 = smul.addr %s105, 8
        %s107 = scalar_lea.vmem [#allocation5], %s106
        %v108 = vld [vmem:[#allocation2] sm:$0xff]
        %v109 = vadd.f32 %v108, 1.0
        %110 = vst [vmem:[%s107] sm:$0xff] %v109
        %s111 = sand.u32 %s45, 1
        %s112 = scalar_lea.sflag [#allocation4], %s111
        %s113 = sand.u32 %s45, 1
        %s114 = smul.addr %s113, 8
        %s115 = scalar_lea.vmem [#allocation5], %s114
        // Predicated region
        $region29: #{tpu_custom_call.1} parent=23 // pred_check
          %p116 = pneg %p55
        $region30: #{tpu_custom_call.1} parent=23 // pred_check_branch
          %118 = sbr.rel (%p116) target = $region32
        $region31: #{tpu_custom_call.1} parent=23 // pred_region
          %s120 = ssub.s32 128, 128
          %121 = vsyncadd %s112, %s120
          %s122 = smul.addr %s16, 128
          %s123 = scalar_lea.hbm %s1, %s122
          %s125 = sshll.u32 %s115, 4
          %s126 = int_to_ptr.vmem [resolvable:$true] %s125
          %128 = dma.vmem_to_hbm [thread:$0]  %s126, 128, %s123, %s112
        $region32: #{tpu_custom_call.1} parent=23 // pred_fallthru
          _
      $region24: #{tpu_custom_call.1} parent=5 // pred_fallthru
        _
      %p129 = scmp.le.s32.totalorder 2, %s11
      // Predicated region
      $region33: #{tpu_custom_call.1} parent=5 // pred_check
        %p130 = pneg %p129
      $region34: #{tpu_custom_call.1} parent=5 // pred_check_branch
        %132 = sbr.rel (%p130) target = $region36
      $region35: #{tpu_custom_call.1} parent=5 // pred_region
        %s133 = ssub.s32 %s11, 2
        // Predicated region
        $region37: #{tpu_custom_call.1} parent=35 // pred_check
          %p134 = pneg %p61
        $region38: #{tpu_custom_call.1} parent=35 // pred_check_branch
          %136 = sbr.rel (%p134) target = $region40
        $region39: #{tpu_custom_call.1} parent=35 // pred_region
          %s137 = sand.u32 %s46, 1
          %s138 = scalar_lea.sflag [#allocation4], %s137
          %s139 = sand.u32 %s46, 1
          %s140 = smul.addr %s139, 8
          %s141 = scalar_lea.vmem [#allocation5], %s140
          %142 = dma.done %s138, 128
        $region40: #{tpu_custom_call.1} parent=35 // pred_fallthru
          _
      $region36: #{tpu_custom_call.1} parent=5 // pred_fallthru
        _
    $region6: #{tpu_custom_call.1} parent=1 // loop_footer
      %s15 = sadd.s32 1, %s11
    $region7: #{tpu_custom_call.1} parent=1 // loop_footer_branch
      %10 = sbr.rel target = $region3
    $region8: #{tpu_custom_call.1} parent=1 // loop_exit
      _
    %143 = vsyncpa [#allocation3], 1
    %s144 = scalar_lea.sflag [#allocation3], 1
    %145 = vsyncpa %s144, 1
    %146 = vsyncpa [#allocation4], 1
    %s147 = scalar_lea.sflag [#allocation4], 1
    %148 = vsyncpa %s147, 1

</llo_original>
